<compile_context>
chip_gen: v7x
topology: tpu7x:2x2x1
jax: 0.10.0
libtpu: 0.0.40
codegen_flags: <defaults>
</compile_context>

<pallas_src>
import numpy as np
import jax
import jax.numpy as jnp
from jax.experimental import pallas as pl
from jax.experimental.pallas import tpu as pltpu

SUBLANE = 8     # vreg sublane width (second-to-last dim constraint)
MXU = 256       # MXU width on v6e/v7x (128-multiple => also fine on v5e)


def _round_up(x, m):
    return ((x + m - 1) // m) * m


def _choose_tb(batch, block_rows):
    """Pick the batch tile: MXU-aligned, >=2 grid steps when batch allows."""
    tb = min(block_rows, batch)
    # Guarantee at least 2 grid steps when the batch is large enough so the
    # "parallel" grid axis can be sharded across both v7x TensorCores.
    if batch >= 2 * MXU:
        tb = min(tb, _round_up(pl.cdiv(batch, 2), MXU))
    if tb >= MXU:
        tb = (tb // MXU) * MXU          # MXU-width multiple -> full matmul passes
    else:
        tb = _round_up(tb, SUBLANE)     # (8, ...) block-shape constraint
    return max(tb, SUBLANE)


def _vmem_estimate(tb, k, h, x_dtype, w_dtype, out_dtype):
    """Bytes of VMEM actually needed by one grid step (incl. pipelining)."""
    bx = jnp.dtype(x_dtype).itemsize
    bw = jnp.dtype(w_dtype).itemsize
    bo = jnp.dtype(out_dtype).itemsize
    return (2 * tb * k * bx            # x tile, double-buffered
            + 2 * tb * h * bo          # out tile, double-buffered
            + (k * h + h * h) * bw     # resident weights, single copy
            + 2 * h * 4                # resident f32 biases
            + 2 * tb * h * 4)          # f32 h1 / h2 intermediates


def _vmem_capacity():
    try:
        return int(pltpu.get_tpu_info().vmem_capacity_bytes)
    except Exception:
        return 64 << 20                # conservative fallback (v7x per-core VMEM)


def mlp_kernel(x_ref, w1_ref, b1_ref, w2_ref, b2_ref, o_ref):
    # Layer 1: Linear (MXU, f32 accumulation) + bias + Tanh in f32.
    h1 = jnp.dot(x_ref[...], w1_ref[...], preferred_element_type=jnp.float32)
    h1 = jnp.tanh(h1 + b1_ref[...])
    # Layer 2: cast the activation to the weight dtype for the MXU pass
    # (keeps bf16 MXU throughput when weights are bf16), accumulate f32.
    h2 = jnp.dot(h1.astype(w2_ref.dtype), w2_ref[...],
                 preferred_element_type=jnp.float32)
    h2 = jnp.tanh(h2 + b2_ref[...])
    o_ref[...] = h2.astype(o_ref.dtype)


def mlp_forward(x, w1, b1, w2, b2, *, block_rows=1024):
    """x: [B, in]; w1: [in, H]; b1: [H]; w2: [H, H]; b2: [H]  ->  [B, H].

    Weights are stored [in_features, out_features] (transpose of PyTorch's
    Linear.weight) so the kernel computes x @ W + b == PyTorch x @ W_pt.T + b.
    """
    B, K = x.shape
    H = w1.shape[1]
    assert w1.shape == (K, H) and w2.shape == (H, H)
    b1 = b1.reshape(1, H).astype(jnp.float32)   # f32 elementwise path
    b2 = b2.reshape(1, H).astype(jnp.float32)

    cap = _vmem_capacity()
    tb = _choose_tb(B, block_rows)
    # Auto-shrink the batch tile if the buffer inventory would not fit VMEM.
    # TODO(synk): for very large H (resident w2 ~ H*H) add a second grid axis
    #             tiling the w2 / output columns instead of shrinking tb.
    while tb > SUBLANE and 2 * _vmem_estimate(tb, K, H, x.dtype, w1.dtype,
                                              x.dtype) > int(0.9 * cap):
        tb = max(SUBLANE, _round_up(tb // 2, SUBLANE))

    need = _vmem_estimate(tb, K, H, x.dtype, w1.dtype, x.dtype)
    vmem_limit = int(min(0.9 * cap, max(2 * need + (4 << 20), 32 << 20)))

    # Whole-array, single-buffered VMEM residency for parameters.
    resident = pl.BlockSpec(memory_space=pltpu.MemorySpace.VMEM)

    out = pl.pallas_call(
        mlp_kernel,
        out_shape=jax.ShapeDtypeStruct((B, H), x.dtype),
        grid_spec=pl.GridSpec(
            grid=(pl.cdiv(B, tb),),
            in_specs=[
                pl.BlockSpec((tb, K), lambda i: (i, 0)),   # x tile (streamed)
                resident,                                  # w1 (VMEM-resident)
                resident,                                  # b1
                resident,                                  # w2
                resident,                                  # b2
            ],
            out_specs=pl.BlockSpec((tb, H), lambda i: (i, 0)),
        ),
        compiler_params=pltpu.CompilerParams(
            dimension_semantics=("parallel",),   # shard batch tiles across TCs (v7x)
            vmem_limit_bytes=vmem_limit),
    )(x, w1, b1, w2, b2)
    return out


def orthogonal_init(key, rows, cols, gain):
    # Mimics torch.nn.init.orthogonal_ (QR of a gaussian, sign-corrected) * gain.
    a = jax.random.normal(key, (max(rows, cols), min(rows, cols)), jnp.float32)
    q, r = jnp.linalg.qr(a)
    q = q * jnp.sign(jnp.diagonal(r))
    if rows < cols:
        q = q.T
    return gain * q[:rows, :cols]


if __name__ == "__main__":
    # Small demo that still exercises the tiling path: B=200 with
    # block_rows=128 gives a 2-step grid with a masked partial last block.
    B, INPUT_SIZE, HIDDEN = 200, 32, 32
    gain = float(np.sqrt(2.0))

    key = jax.random.PRNGKey(0)
    kx, k1, k2 = jax.random.split(key, 3)

    x = jax.random.normal(kx, (B, INPUT_SIZE), jnp.float32)

    # PyTorch Linear weight is [out, in]; store transposed ([in, out]) for x @ W.
    w1 = orthogonal_init(k1, HIDDEN, INPUT_SIZE, gain).T   # [in, H]
    w2 = orthogonal_init(k2, HIDDEN, HIDDEN, gain).T       # [H, H]
    b1 = jnp.zeros((HIDDEN,), jnp.float32)                 # constant_(0)
    b2 = jnp.zeros((HIDDEN,), jnp.float32)

    # ---- f32 path (2 grid steps, partial last block) ----
    out = mlp_forward(x, w1, b1, w2, b2, block_rows=128)
    out = jax.block_until_ready(out)
    ref = jnp.tanh(jnp.tanh(x @ w1 + b1) @ w2 + b2)
    np.testing.assert_allclose(np.asarray(out), np.asarray(ref),
                               atol=1e-4, rtol=1e-4)

    # ---- f32 path, default tile (single-step grid) ----
    out_big = mlp_forward(x, w1, b1, w2, b2)
    out_big = jax.block_until_ready(out_big)
    np.testing.assert_allclose(np.asarray(out_big), np.asarray(ref),
                               atol=1e-4, rtol=1e-4)

    # ---- bf16 path (halves the HBM-bound x / out streams on v6e / v7x) ----
    xb = x.astype(jnp.bfloat16)
    w1b = w1.astype(jnp.bfloat16)
    w2b = w2.astype(jnp.bfloat16)
    out_b = mlp_forward(xb, w1b, b1, w2b, b2, block_rows=128)
    out_b = jax.block_until_ready(out_b)
    h1 = jnp.tanh(jnp.dot(xb, w1b, preferred_element_type=jnp.float32) + b1)
    h2 = jnp.tanh(jnp.dot(h1.astype(jnp.bfloat16), w2b,
                          preferred_element_type=jnp.float32) + b2)
    ref_b = h2.astype(jnp.bfloat16)
    np.testing.assert_allclose(np.asarray(out_b.astype(jnp.float32)),
                               np.asarray(ref_b.astype(jnp.float32)),
                               atol=5e-2, rtol=5e-2)

    print("KERNEL_OK")
</pallas_src>

<mosaic_0001>
module attributes {stable_mosaic.version = 11 : i64} {
  func.func @mlp_kernel(%arg0: i32, %arg1: memref<128x32xf32, #tpu.memory_space<vmem>>, %arg2: memref<32x32xf32, #tpu.memory_space<vmem>>, %arg3: memref<1x32xf32, #tpu.memory_space<vmem>>, %arg4: memref<32x32xf32, #tpu.memory_space<vmem>>, %arg5: memref<1x32xf32, #tpu.memory_space<vmem>>, %arg6: memref<128x32xf32, #tpu.memory_space<vmem>>) attributes {dimension_semantics = [#tpu.dimension_semantics<parallel>], iteration_bounds = array<i64: 2>, scalar_prefetch = 0 : i64, scratch_operands = 0 : i64, tpu.core_type = #tpu.core_type<tc>, window_params = [{transform_indices = @transform_0, window_bounds = array<i64: 128, 32>}, {pipeline_mode = #tpu.pipeline_mode<synchronous>, transform_indices = @transform_1, window_bounds = array<i64: 32, 32>}, {pipeline_mode = #tpu.pipeline_mode<synchronous>, transform_indices = @transform_2, window_bounds = array<i64: 1, 32>}, {pipeline_mode = #tpu.pipeline_mode<synchronous>, transform_indices = @transform_3, window_bounds = array<i64: 32, 32>}, {pipeline_mode = #tpu.pipeline_mode<synchronous>, transform_indices = @transform_4, window_bounds = array<i64: 1, 32>}, {transform_indices = @transform_5, window_bounds = array<i64: 128, 32>}]} {
    %c0 = arith.constant 0 : index
    %c0_0 = arith.constant 0 : index
    %0 = vector.load %arg1[%c0, %c0_0] : memref<128x32xf32, #tpu.memory_space<vmem>>, vector<128x32xf32>
    %c0_1 = arith.constant 0 : index
    %c0_2 = arith.constant 0 : index
    %1 = vector.load %arg2[%c0_1, %c0_2] : memref<32x32xf32, #tpu.memory_space<vmem>>, vector<32x32xf32>
    %cst = arith.constant dense<0.000000e+00> : vector<128x32xf32>
    %2 = tpu.matmul %0, %1, %cst {dimension_numbers = #tpu.dot_dimension_numbers<[1], [0], [0], [1], [0, 0, 1, 1], [], []>} : vector<128x32xf32>, vector<32x32xf32>, vector<128x32xf32> -> vector<128x32xf32>
    %c0_3 = arith.constant 0 : index
    %c0_4 = arith.constant 0 : index
    %3 = vector.load %arg3[%c0_3, %c0_4] : memref<1x32xf32, #tpu.memory_space<vmem>>, vector<1x32xf32>
    %4 = vector.broadcast %3 : vector<1x32xf32> to vector<128x32xf32>
    %5 = arith.addf %2, %4 : vector<128x32xf32>
    %6 = math.tanh %5 : vector<128x32xf32>
    %c0_5 = arith.constant 0 : index
    %c0_6 = arith.constant 0 : index
    %7 = vector.load %arg4[%c0_5, %c0_6] : memref<32x32xf32, #tpu.memory_space<vmem>>, vector<32x32xf32>
    %cst_7 = arith.constant dense<0.000000e+00> : vector<128x32xf32>
    %8 = tpu.matmul %6, %7, %cst_7 {dimension_numbers = #tpu.dot_dimension_numbers<[1], [0], [0], [1], [0, 0, 1, 1], [], []>} : vector<128x32xf32>, vector<32x32xf32>, vector<128x32xf32> -> vector<128x32xf32>
    %c0_8 = arith.constant 0 : index
    %c0_9 = arith.constant 0 : index
    %9 = vector.load %arg5[%c0_8, %c0_9] : memref<1x32xf32, #tpu.memory_space<vmem>>, vector<1x32xf32>
    %10 = vector.broadcast %9 : vector<1x32xf32> to vector<128x32xf32>
    %11 = arith.addf %8, %10 : vector<128x32xf32>
    %12 = math.tanh %11 : vector<128x32xf32>
    %c0_10 = arith.constant 0 : index
    %c0_11 = arith.constant 0 : index
    %13 = vector.load %arg6[%c0_10, %c0_11] : memref<128x32xf32, #tpu.memory_space<vmem>>, vector<128x32xf32>
    tpu.vector_store %arg6[%c0_10, %c0_11], %12 {strides = array<i32>} : memref<128x32xf32, #tpu.memory_space<vmem>>, vector<128x32xf32>,
    return
  }
  func.func @transform_0(%arg0: i32) -> (i32, i32) {
    %c0_i32 = arith.constant 0 : i32
    %c0_i32_0 = arith.constant 0 : i32
    return %arg0, %c0_i32 : i32, i32
  }
  func.func @transform_1(%arg0: i32) -> (i32, i32) {
    %c0_i32 = arith.constant 0 : i32
    %c0_i32_0 = arith.constant 0 : i32
    %c0_i32_1 = arith.constant 0 : i32
    return %c0_i32, %c0_i32_0 : i32, i32
  }
  func.func @transform_2(%arg0: i32) -> (i32, i32) {
    %c0_i32 = arith.constant 0 : i32
    %c0_i32_0 = arith.constant 0 : i32
    %c0_i32_1 = arith.constant 0 : i32
    return %c0_i32, %c0_i32_0 : i32, i32
  }
  func.func @transform_3(%arg0: i32) -> (i32, i32) {
    %c0_i32 = arith.constant 0 : i32
    %c0_i32_0 = arith.constant 0 : i32
    %c0_i32_1 = arith.constant 0 : i32
    return %c0_i32, %c0_i32_0 : i32, i32
  }
  func.func @transform_4(%arg0: i32) -> (i32, i32) {
    %c0_i32 = arith.constant 0 : i32
    %c0_i32_0 = arith.constant 0 : i32
    %c0_i32_1 = arith.constant 0 : i32
    return %c0_i32, %c0_i32_0 : i32, i32
  }
  func.func @transform_5(%arg0: i32) -> (i32, i32) {
    %c0_i32 = arith.constant 0 : i32
    %c0_i32_0 = arith.constant 0 : i32
    return %arg0, %c0_i32 : i32, i32
  }
}

</mosaic_0001>

<llo_original>
// kernel: tpu_custom_call.1
$region0: #{tpu_custom_call.1}
  #allocation0 [shape = 'u32[]', space=smem, size = 0x4, offset = 0x4, fixed_abs, tag = 'smem constant byte address 0x4 - core index']
  #allocation1 [shape = 'u32[144,128]{1,0:T(1,128)}', space=vmem, size = 0x12000, scoped, tag = 'internal scratch']
  %s0 = inlined_call_operand.vmem [shape: f32[200,32], index: 0, kind: input, shape index: {}]
  %s1 = inlined_call_operand.vmem [shape: f32[32,32], index: 1, kind: input, shape index: {}]
  %s2 = inlined_call_operand.vmem [shape: f32[1,32], index: 2, kind: input, shape index: {}]
  %s3 = inlined_call_operand.vmem [shape: f32[32,32], index: 3, kind: input, shape index: {}]
  %s4 = inlined_call_operand.vmem [shape: f32[1,32], index: 4, kind: input, shape index: {}]
  %s5 = inlined_call_operand.vmem [shape: f32[200,32], index: 5, kind: output, shape index: {}]
  %s6 = sld [smem:[#allocation0]]
  $region101: #{tpu_custom_call.1} parent=0
    _
  %s8 = ssub.s32 1, %s6
  %s9 = scalar_select 0, %s8, %s6
  $region1: #{tpu_custom_call.1} parent=0
    #allocation2 [shape = 'u8[131072]{0}', space=vmem, size = 0x20000, scoped, tag = 'output window, operand 0']
    loop: start=0, step=1, limit=4
    $region2: #{tpu_custom_call.1} parent=1 // loop_pre_header
      _
    $region3: #{tpu_custom_call.1} parent=1 // loop_header
      %s11 = sphi 0, %s15
      %p12 = scmp.ge.s32.totalorder %s11, 4
      %s21 = sphi 0, %s23
      %s24 = sphi 0, %s21
      %s25 = sphi 0, %s24
      %s41 = sphi 0, %s25
      %s45 = sphi 0, %s45
      %s47 = sphi 0, %s45
      %s48 = sphi 0, %s47
      %s62 = sphi 0, %s48
      %s66 = sphi 0, %s66
      %s68 = sphi 0, %s66
      %s69 = sphi 0, %s68
      %s83 = sphi 0, %s69
      %s87 = sphi 0, %s87
      %s89 = sphi 0, %s87
      %s90 = sphi 0, %s89
      %s104 = sphi 0, %s90
      %s108 = sphi 0, %s108
      %s110 = sphi 0, %s108
      %s111 = sphi 0, %s110
      %s125 = sphi 0, %s111
      %s131 = sphi 0, %s133
      %s134 = sphi 0, %s131
      %s135 = sphi 0, %s134
      %s151 = sphi 0, %s135
    $region4: #{tpu_custom_call.1} parent=1 // loop_header_branch
      %14 = sbr.rel (%p12) target = $region8
    $region5: #{tpu_custom_call.1} parent=1 // loop_body
      %s16 = ssub.s32 %s11, 1
      %s17 = ssub.s32 %s11, 2
      %s18 = sadd.s32 %s11, 1
      %s19 = ssub.s32 %s11, %s18
      %p20 = scmp.eq.s32.totalorder %s19, 0
      %s22 = sadd.s32 %s21, 1
      %s23 = scalar_select %p20, %s21, %s22
      %p26 = pneg %p20
      %p27 = scmp.eq.s32.totalorder %s11, 1
      %p28 = por %p26, %p27
      %p29 = scmp.ne.s32.totalorder %s21, %s24
      %p30 = scmp.eq.s32.totalorder %s11, 0
      %p31 = por %p29, %p30
      %p32 = scmp.ne.s32.totalorder %s21, %s24
      %p33 = scmp.eq.s32.totalorder %s16, 1
      %p34 = por %p32, %p33
      %p35 = scmp.ne.s32.totalorder %s24, %s25
      %p36 = scmp.eq.s32.totalorder %s16, 0
      %p37 = por %p35, %p36
      %p38 = scmp.ne.s32.totalorder %s24, %s25
      %p39 = scmp.eq.s32.totalorder %s17, 1
      %p40 = por %p38, %p39
      %p42 = scmp.ne.s32.totalorder %s25, %s41
      %p43 = scmp.eq.s32.totalorder %s17, 0
      %p44 = por %p42, %p43
      %s46 = sadd.s32 %s45, 1
      %p49 = scmp.eq.s32.totalorder %s11, 1
      %p50 = scmp.ne.s32.totalorder %s45, %s47
      %p51 = scmp.eq.s32.totalorder %s11, 0
      %p52 = por %p50, %p51
      %p53 = scmp.ne.s32.totalorder %s45, %s47
      %p54 = scmp.eq.s32.totalorder %s16, 1
      %p55 = por %p53, %p54
      %p56 = scmp.ne.s32.totalorder %s47, %s48
      %p57 = scmp.eq.s32.totalorder %s16, 0
      %p58 = por %p56, %p57
      %p59 = scmp.ne.s32.totalorder %s47, %s48
      %p60 = scmp.eq.s32.totalorder %s17, 1
      %p61 = por %p59, %p60
      %p63 = scmp.ne.s32.totalorder %s48, %s62
      %p64 = scmp.eq.s32.totalorder %s17, 0
      %p65 = por %p63, %p64
      %s67 = sadd.s32 %s66, 1
      %p70 = scmp.eq.s32.totalorder %s11, 1
      %p71 = scmp.ne.s32.totalorder %s66, %s68
      %p72 = scmp.eq.s32.totalorder %s11, 0
      %p73 = por %p71, %p72
      %p74 = scmp.ne.s32.totalorder %s66, %s68
      %p75 = scmp.eq.s32.totalorder %s16, 1
      %p76 = por %p74, %p75
      %p77 = scmp.ne.s32.totalorder %s68, %s69
      %p78 = scmp.eq.s32.totalorder %s16, 0
      %p79 = por %p77, %p78
      %p80 = scmp.ne.s32.totalorder %s68, %s69
      %p81 = scmp.eq.s32.totalorder %s17, 1
      %p82 = por %p80, %p81
      %p84 = scmp.ne.s32.totalorder %s69, %s83
      %p85 = scmp.eq.s32.totalorder %s17, 0
      %p86 = por %p84, %p85
      %s88 = sadd.s32 %s87, 1
      %p91 = scmp.eq.s32.totalorder %s11, 1
      %p92 = scmp.ne.s32.totalorder %s87, %s89
      %p93 = scmp.eq.s32.totalorder %s11, 0
      %p94 = por %p92, %p93
      %p95 = scmp.ne.s32.totalorder %s87, %s89
      %p96 = scmp.eq.s32.totalorder %s16, 1
      %p97 = por %p95, %p96
      %p98 = scmp.ne.s32.totalorder %s89, %s90
      %p99 = scmp.eq.s32.totalorder %s16, 0
      %p100 = por %p98, %p99
      %p101 = scmp.ne.s32.totalorder %s89, %s90
      %p102 = scmp.eq.s32.totalorder %s17, 1
      %p103 = por %p101, %p102
      %p105 = scmp.ne.s32.totalorder %s90, %s104
      %p106 = scmp.eq.s32.totalorder %s17, 0
      %p107 = por %p105, %p106
      %s109 = sadd.s32 %s108, 1
      %p112 = scmp.eq.s32.totalorder %s11, 1
      %p113 = scmp.ne.s32.totalorder %s108, %s110
      %p114 = scmp.eq.s32.totalorder %s11, 0
      %p115 = por %p113, %p114
      %p116 = scmp.ne.s32.totalorder %s108, %s110
      %p117 = scmp.eq.s32.totalorder %s16, 1
      %p118 = por %p116, %p117
      %p119 = scmp.ne.s32.totalorder %s110, %s111
      %p120 = scmp.eq.s32.totalorder %s16, 0
      %p121 = por %p119, %p120
      %p122 = scmp.ne.s32.totalorder %s110, %s111
      %p123 = scmp.eq.s32.totalorder %s17, 1
      %p124 = por %p122, %p123
      %p126 = scmp.ne.s32.totalorder %s111, %s125
      %p127 = scmp.eq.s32.totalorder %s17, 0
      %p128 = por %p126, %p127
      %s129 = ssub.s32 %s11, %s18
      %p130 = scmp.eq.s32.totalorder %s129, 0
      %s132 = sadd.s32 %s131, 1
      %s133 = scalar_select %p130, %s131, %s132
      %p136 = pneg %p130
      %p137 = scmp.eq.s32.totalorder %s11, 1
      %p138 = por %p136, %p137
      %p139 = scmp.ne.s32.totalorder %s131, %s134
      %p140 = scmp.eq.s32.totalorder %s11, 0
      %p141 = por %p139, %p140
      %p142 = scmp.ne.s32.totalorder %s131, %s134
      %p143 = scmp.eq.s32.totalorder %s16, 1
      %p144 = por %p142, %p143
      %p145 = scmp.ne.s32.totalorder %s134, %s135
      %p146 = scmp.eq.s32.totalorder %s16, 0
      %p147 = por %p145, %p146
      %p148 = scmp.ne.s32.totalorder %s134, %s135
      %p149 = scmp.eq.s32.totalorder %s17, 1
      %p150 = por %p148, %p149
      %p152 = scmp.ne.s32.totalorder %s135, %s151
      %p153 = scmp.eq.s32.totalorder %s17, 0
      %p154 = por %p152, %p153
      %p155 = scmp.le.s32.totalorder 1, %s11
      %p156 = scmp.lt.s32.totalorder %s11, 3
      %p157 = pnand %p155, %p156
      %p158 = pneg %p157
      // Predicated region
      $region9: #{tpu_custom_call.1} parent=5 // pred_check
        _
      $region10: #{tpu_custom_call.1} parent=5 // pred_check_branch
        %160 = sbr.rel (%p157) target = $region12
      $region11: #{tpu_custom_call.1} parent=5 // pred_region
        %s161 = ssub.s32 %s11, 1
        // Predicated region
        $region13: #{tpu_custom_call.1} parent=11 // pred_check
          %p162 = pneg %p58
        $region14: #{tpu_custom_call.1} parent=11 // pred_check_branch
          %164 = sbr.rel (%p162) target = $region16
        $region15: #{tpu_custom_call.1} parent=11 // pred_region
          _
        $region16: #{tpu_custom_call.1} parent=11 // pred_fallthru
          _
        // Predicated region
        $region17: #{tpu_custom_call.1} parent=11 // pred_check
          %p165 = pneg %p79
        $region18: #{tpu_custom_call.1} parent=11 // pred_check_branch
          %167 = sbr.rel (%p165) target = $region20
        $region19: #{tpu_custom_call.1} parent=11 // pred_region
          _
        $region20: #{tpu_custom_call.1} parent=11 // pred_fallthru
          _
        // Predicated region
        $region21: #{tpu_custom_call.1} parent=11 // pred_check
          %p168 = pneg %p100
        $region22: #{tpu_custom_call.1} parent=11 // pred_check_branch
          %170 = sbr.rel (%p168) target = $region24
        $region23: #{tpu_custom_call.1} parent=11 // pred_region
          _
        $region24: #{tpu_custom_call.1} parent=11 // pred_fallthru
          _
        // Predicated region
        $region25: #{tpu_custom_call.1} parent=11 // pred_check
          %p171 = pneg %p121
        $region26: #{tpu_custom_call.1} parent=11 // pred_check_branch
          %173 = sbr.rel (%p171) target = $region28
        $region27: #{tpu_custom_call.1} parent=11 // pred_region
          _
        $region28: #{tpu_custom_call.1} parent=11 // pred_fallthru
          _
      $region12: #{tpu_custom_call.1} parent=5 // pred_fallthru
        _
      %p174 = scmp.lt.s32.totalorder %s11, 2
      // Predicated region
      $region29: #{tpu_custom_call.1} parent=5 // pred_check
        %p175 = pneg %p174
      $region30: #{tpu_custom_call.1} parent=5 // pred_check_branch
        %177 = sbr.rel (%p175) target = $region32
      $region31: #{tpu_custom_call.1} parent=5 // pred_region
        // Predicated region
        $region33: #{tpu_custom_call.1} parent=31 // pred_check
          %p178 = pneg %p31
        $region34: #{tpu_custom_call.1} parent=31 // pred_check_branch
          %180 = sbr.rel (%p178) target = $region36
        $region35: #{tpu_custom_call.1} parent=31 // pred_region
          %s181 = smul.u32 16, %s11
          %s182 = ssub.s32 25, %s181
          %p183 = scmp.lt.s32.totalorder %s182, 16
          %s184 = scalar_select %p183, %s182, 16
          %s185 = smul.u32 128, %s184
          %p186 = scmp.lt.s32.totalorder %s181, 24
          %s187 = scalar_select %p186, %s181, 24
          %s188 = smul.addr %s187, 8
          %s189 = scalar_lea.vmem %s0, %s188
          %s190 = smul.u32 16, %s11
          %s191 = ssub.s32 25, %s190
          %p192 = scmp.lt.s32.totalorder %s191, 16
          %s193 = scalar_select %p192, %s191, 16
          %s194 = smul.u32 128, %s193
        $region36: #{tpu_custom_call.1} parent=31 // pred_fallthru
          _
      $region32: #{tpu_custom_call.1} parent=5 // pred_fallthru
        _
      %p195 = scmp.le.s32.totalorder 1, %s11
      %p196 = scmp.lt.s32.totalorder %s11, 3
      %p197 = pnand %p195, %p196
      %p198 = pneg %p197
      // Predicated region
      $region37: #{tpu_custom_call.1} parent=5 // pred_check
        _
      $region38: #{tpu_custom_call.1} parent=5 // pred_check_branch
        %200 = sbr.rel (%p197) target = $region40
      $region39: #{tpu_custom_call.1} parent=5 // pred_region
        %s201 = ssub.s32 %s11, 1
        %s202 = smul.u32 16, %s16
        %s203 = ssub.s32 25, %s202
        %p204 = scmp.lt.s32.totalorder %s203, 16
        %s205 = scalar_select %p204, %s203, 16
        %s206 = smul.u32 128, %s205
        %p207 = scmp.lt.s32.totalorder %s202, 24
        %s208 = scalar_select %p207, %s202, 24
        %s209 = smul.addr %s208, 8
        %s210 = scalar_lea.vmem %s0, %s209
        %p211 = pneg %p37
        %p212 = pneg %p34
        %p213 = pneg %p58
        %p214 = pneg %p55
        %p215 = pneg %p79
        %p216 = pneg %p76
        %p217 = pneg %p100
        %p218 = pneg %p97
        %p219 = pneg %p121
        %p220 = pneg %p118
        %p221 = pneg %p147
        %p222 = pneg %p144
        %s223 = sand.u32 %s134, 1
        %s224 = sand.u32 %s134, 1
        %s225 = smul.addr %s224, 128
        %s226 = scalar_lea.vmem [#allocation2], %s225
        %s227 = smul.u32 16, %s16
        %s228 = ssub.s32 25, %s227
        %p229 = scmp.lt.s32.totalorder %s228, 16
        %s230 = scalar_select %p229, %s228, 16
        %s231 = smul.u32 128, %s230
        %p232 = scmp.lt.s32.totalorder %s227, 24
        %s233 = scalar_select %p232, %s227, 24
        %s234 = smul.addr %s233, 8
        %s235 = scalar_lea.vmem %s0, %s234
        %s236 = smul.u32 16, %s16
        %s237 = ssub.s32 25, %s236
        %p238 = scmp.lt.s32.totalorder %s237, 16
        %s239 = scalar_select %p238, %s237, 16
        %s240 = smul.u32 128, %s239
        %s241 = smul.u32 16, %s16
        %s242 = ssub.s32 25, %s241
        %p243 = scmp.lt.s32.totalorder %s242, 16
        %s244 = scalar_select %p243, %s242, 16
        %s245 = smul.u32 128, %s244
        %v246 = vld [vmem:[%s235] sm:$0xff]
        %v247 = vld [vmem:[%s235 + $0x8] sm:$0xff]
        %v248 = vld [vmem:[%s235 + $0x10] sm:$0xff]
        %v249 = vld [vmem:[%s235 + $0x18] sm:$0xff]
        %v250 = vld [vmem:[%s235 + $0x20] sm:$0xff]
        %v251 = vld [vmem:[%s235 + $0x28] sm:$0xff]
        %v252 = vld [vmem:[%s235 + $0x30] sm:$0xff]
        %v253 = vld [vmem:[%s235 + $0x38] sm:$0xff]
        %v254 = vld [vmem:[%s235 + $0x40] sm:$0xff]
        %v255 = vld [vmem:[%s235 + $0x48] sm:$0xff]
        %v256 = vld [vmem:[%s235 + $0x50] sm:$0xff]
        %v257 = vld [vmem:[%s235 + $0x58] sm:$0xff]
        %v258 = vld [vmem:[%s235 + $0x60] sm:$0xff]
        %v259 = vld [vmem:[%s235 + $0x68] sm:$0xff]
        %v260 = vld [vmem:[%s235 + $0x70] sm:$0xff]
        %v261 = vld [vmem:[%s235 + $0x78] sm:$0xff]
        %v262 = vld [vmem:[%s1] sm:$0xff]
        %v263 = vld [vmem:[%s1 + $0x8] sm:$0xff]
        %v264 = vld [vmem:[%s1 + $0x10] sm:$0xff]
        %v265 = vld [vmem:[%s1 + $0x18] sm:$0xff]
        %v266 = vld [vmem:[%s2] sm:$0x1]
        %v268 = vlaneseq
        %v269 = vshrl.u32 %v268, 7
        %v270 = vsub.s32 0, %v269
        %v271 = vrot.slane %v266, %v270
        %vm273 = vcmask 261120
        %v275 = vsel %vm273, %v246, 0
        %v278 = vsel %vm273, %v247, 0
        %v281 = vsel %vm273, %v248, 0
        %v284 = vsel %vm273, %v249, 0
        %v287 = vsel %vm273, %v250, 0
        %v290 = vsel %vm273, %v251, 0
        %v293 = vsel %vm273, %v252, 0
        %v296 = vsel %vm273, %v253, 0
        %v299 = vsel %vm273, %v254, 0
        %v302 = vsel %vm273, %v255, 0
        %v305 = vsel %vm273, %v256, 0
        %v308 = vsel %vm273, %v257, 0
        %v311 = vsel %vm273, %v258, 0
        %v314 = vsel %vm273, %v259, 0
        %v317 = vsel %vm273, %v260, 0
        %v320 = vsel %vm273, %v261, 0
        %322 = vmatprep.subr.mxu0 0.0
        %323 = vmatpush1.msra.mxu0 %v262
        %324 = vmatprep.subr.mxu0 0.0
        %325 = vmatpush1.msra.mxu0 %v263
        %326 = vmatprep.subr.mxu0 0.0
        %327 = vmatpush1.msra.mxu0 %v264
        %328 = vmatprep.subr.mxu0 0.0
        %329 = vmatpush1.msra.mxu0 %v265
        %330 = vmatprep.subr.mxu0 0.0
        %331 = vmatpush1.msra.mxu0 0.0
        %332 = vmatprep.subr.mxu0 0.0
        %333 = vmatpush1.msra.mxu0 0.0
        %334 = vmatprep.subr.mxu0 0.0
        %335 = vmatpush1.msra.mxu0 0.0
        %336 = vmatprep.subr.mxu0 0.0
        %337 = vmatpush1.msra.mxu0 0.0
        %338 = vmatprep.subr.mxu0 0.0
        %339 = vmatpush1.msra.mxu0 0.0
        %340 = vmatprep.subr.mxu0 0.0
        %341 = vmatpush1.msra.mxu0 0.0
        %342 = vmatprep.subr.mxu0 0.0
        %343 = vmatpush1.msra.mxu0 0.0
        %344 = vmatprep.subr.mxu0 0.0
        %345 = vmatpush1.msra.mxu0 0.0
        %346 = vmatprep.subr.mxu0 0.0
        %347 = vmatpush1.msra.mxu0 0.0
        %348 = vmatprep.subr.mxu0 0.0
        %349 = vmatpush1.msra.mxu0 0.0
        %350 = vmatprep.subr.mxu0 0.0
        %351 = vmatpush1.msra.mxu0 0.0
        %352 = vmatprep.subr.mxu0 0.0
        %353 = vmatpush1.msra.mxu0 0.0
        %354 = vmatprep.subr.mxu0 0.0
        %355 = vmatpush1.msra.mxu0 0.0
        %356 = vmatprep.subr.mxu0 0.0
        %357 = vmatpush1.msra.mxu0 0.0
        %358 = vmatprep.subr.mxu0 0.0
        %359 = vmatpush1.msra.mxu0 0.0
        %360 = vmatprep.subr.mxu0 0.0
        %361 = vmatpush1.msra.mxu0 0.0
        %362 = vmatprep.subr.mxu0 0.0
        %363 = vmatpush1.msra.mxu0 0.0
        %364 = vmatprep.subr.mxu0 0.0
        %365 = vmatpush1.msra.mxu0 0.0
        %366 = vmatprep.subr.mxu0 0.0
        %367 = vmatpush1.msra.mxu0 0.0
        %368 = vmatprep.subr.mxu0 0.0
        %369 = vmatpush1.msra.mxu0 0.0
        %370 = vmatprep.subr.mxu0 0.0
        %371 = vmatpush1.msra.mxu0 0.0
        %372 = vmatprep.subr.mxu0 0.0
        %373 = vmatpush1.msra.mxu0 0.0
        %374 = vmatprep.subr.mxu0 0.0
        %375 = vmatpush1.msra.mxu0 0.0
        %376 = vmatprep.subr.mxu0 0.0
        %377 = vmatpush1.msra.mxu0 0.0
        %378 = vmatprep.subr.mxu0 0.0
        %379 = vmatpush1.msra.mxu0 0.0
        %380 = vmatprep.subr.mxu0 0.0
        %381 = vmatpush1.msra.mxu0 0.0
        %382 = vmatprep.subr.mxu0 0.0
        %383 = vmatpush1.msra.mxu0 0.0
        %384 = vmatprep.subr.mxu0 0.0
        %385 = vmatpush1.msra.mxu0 0.0
        %386 = vmatprep.mubr.f32.mxu0 0.0
        %387 = vmatmul.mubr.f32.gmra.mrb[0].mxu0 %v275
        %v388 = vpop.f32.mrb[0].mxu0
        %v389 = vadd.f32 %v271, %v388
        %v390 = vpop.f32.mrb[0].mxu0
        %391 = vmatprep.mubr.f32.mxu0 0.0
        %392 = vmatmul.mubr.f32.gmra.mrb[0].mxu0 %v278
        %v393 = vpop.f32.mrb[0].mxu0
        %v394 = vadd.f32 %v271, %v393
        %v395 = vpop.f32.mrb[0].mxu0
        %396 = vmatprep.mubr.f32.mxu0 0.0
        %397 = vmatmul.mubr.f32.gmra.mrb[0].mxu0 %v281
        %v398 = vpop.f32.mrb[0].mxu0
        %v399 = vadd.f32 %v271, %v398
        %v400 = vpop.f32.mrb[0].mxu0
        %401 = vmatprep.mubr.f32.mxu0 0.0
        %402 = vmatmul.mubr.f32.gmra.mrb[0].mxu0 %v284
        %v403 = vpop.f32.mrb[0].mxu0
        %v404 = vadd.f32 %v271, %v403
        %v405 = vpop.f32.mrb[0].mxu0
        %406 = vmatprep.mubr.f32.mxu0 0.0
        %407 = vmatmul.mubr.f32.gmra.mrb[0].mxu0 %v287
        %v408 = vpop.f32.mrb[0].mxu0
        %v409 = vadd.f32 %v271, %v408
        %v410 = vpop.f32.mrb[0].mxu0
        %411 = vmatprep.mubr.f32.mxu0 0.0
        %412 = vmatmul.mubr.f32.gmra.mrb[0].mxu0 %v290
        %v413 = vpop.f32.mrb[0].mxu0
        %v414 = vadd.f32 %v271, %v413
        %v415 = vpop.f32.mrb[0].mxu0
        %416 = vmatprep.mubr.f32.mxu0 0.0
        %417 = vmatmul.mubr.f32.gmra.mrb[0].mxu0 %v293
        %v418 = vpop.f32.mrb[0].mxu0
        %v419 = vadd.f32 %v271, %v418
        %v420 = vpop.f32.mrb[0].mxu0
        %421 = vmatprep.mubr.f32.mxu0 0.0
        %422 = vmatmul.mubr.f32.gmra.mrb[0].mxu0 %v296
        %v423 = vpop.f32.mrb[0].mxu0
        %v424 = vadd.f32 %v271, %v423
        %v425 = vpop.f32.mrb[0].mxu0
        %426 = vmatprep.mubr.f32.mxu0 0.0
        %427 = vmatmul.mubr.f32.gmra.mrb[0].mxu0 %v299
        %v428 = vpop.f32.mrb[0].mxu0
        %v429 = vadd.f32 %v271, %v428
        %v430 = vpop.f32.mrb[0].mxu0
        %431 = vmatprep.mubr.f32.mxu0 0.0
        %432 = vmatmul.mubr.f32.gmra.mrb[0].mxu0 %v302
        %v433 = vpop.f32.mrb[0].mxu0
        %v434 = vadd.f32 %v271, %v433
        %v435 = vpop.f32.mrb[0].mxu0
        %436 = vmatprep.mubr.f32.mxu0 0.0
        %437 = vmatmul.mubr.f32.gmra.mrb[0].mxu0 %v305
        %v438 = vpop.f32.mrb[0].mxu0
        %v439 = vadd.f32 %v271, %v438
        %v440 = vpop.f32.mrb[0].mxu0
        %441 = vmatprep.mubr.f32.mxu0 0.0
        %442 = vmatmul.mubr.f32.gmra.mrb[0].mxu0 %v308
        %v443 = vpop.f32.mrb[0].mxu0
        %v444 = vadd.f32 %v271, %v443
        %v445 = vpop.f32.mrb[0].mxu0
        %446 = vmatprep.mubr.f32.mxu0 0.0
        %447 = vmatmul.mubr.f32.gmra.mrb[0].mxu0 %v311
        %v448 = vpop.f32.mrb[0].mxu0
        %v449 = vadd.f32 %v271, %v448
        %v450 = vpop.f32.mrb[0].mxu0
        %451 = vmatprep.mubr.f32.mxu0 0.0
        %452 = vmatmul.mubr.f32.gmra.mrb[0].mxu0 %v314
        %v453 = vpop.f32.mrb[0].mxu0
        %v454 = vadd.f32 %v271, %v453
        %v455 = vpop.f32.mrb[0].mxu0
        %456 = vmatprep.mubr.f32.mxu0 0.0
        %457 = vmatmul.mubr.f32.gmra.mrb[0].mxu0 %v317
        %v458 = vpop.f32.mrb[0].mxu0
        %v459 = vadd.f32 %v271, %v458
        %v460 = vpop.f32.mrb[0].mxu0
        %461 = vmatprep.mubr.f32.mxu0 0.0
        %462 = vmatmul.mubr.f32.gmra.mrb[0].mxu0 %v320
        %v463 = vpop.f32.mrb[0].mxu0
        %v464 = vadd.f32 %v271, %v463
        %v465 = vpop.f32.mrb[0].mxu0
        %466 = vdwg.mxu0
        %v467 = vtanh.pop %v389
        %v468 = vtanh.pop %v394
        %v469 = vtanh.pop %v399
        %v470 = vtanh.pop %v404
        %v471 = vtanh.pop %v409
        %v472 = vtanh.pop %v414
        %v473 = vtanh.pop %v419
        %v474 = vtanh.pop %v424
        %v475 = vtanh.pop %v429
        %v476 = vtanh.pop %v434
        %v477 = vtanh.pop %v439
        %v478 = vtanh.pop %v444
        %v479 = vtanh.pop %v449
        %v480 = vtanh.pop %v454
        %v481 = vtanh.pop %v459
        %v482 = vtanh.pop %v464
        %v483 = vld [vmem:[%s3] sm:$0xff]
        %v484 = vld [vmem:[%s3 + $0x8] sm:$0xff]
        %v485 = vld [vmem:[%s3 + $0x10] sm:$0xff]
        %v486 = vld [vmem:[%s3 + $0x18] sm:$0xff]
        %v487 = vld [vmem:[%s4] sm:$0x1]
        %v489 = vlaneseq
        %v490 = vshrl.u32 %v489, 7
        %v491 = vsub.s32 0, %v490
        %v492 = vrot.slane %v487, %v491
        %v495 = vsel %vm273, %v467, 0
        %v498 = vsel %vm273, %v468, 0
        %v501 = vsel %vm273, %v469, 0
        %v504 = vsel %vm273, %v470, 0
        %v507 = vsel %vm273, %v471, 0
        %v510 = vsel %vm273, %v472, 0
        %v513 = vsel %vm273, %v473, 0
        %v516 = vsel %vm273, %v474, 0
        %v519 = vsel %vm273, %v475, 0
        %v522 = vsel %vm273, %v476, 0
        %v525 = vsel %vm273, %v477, 0
        %v528 = vsel %vm273, %v478, 0
        %v531 = vsel %vm273, %v479, 0
        %v534 = vsel %vm273, %v480, 0
        %v537 = vsel %vm273, %v481, 0
        %v540 = vsel %vm273, %v482, 0
        %542 = vmatprep.subr.mxu0 0.0
        %543 = vmatpush1.msra.mxu0 %v483
        %544 = vmatprep.subr.mxu0 0.0
        %545 = vmatpush1.msra.mxu0 %v484
        %546 = vmatprep.subr.mxu0 0.0
        %547 = vmatpush1.msra.mxu0 %v485
        %548 = vmatprep.subr.mxu0 0.0
        %549 = vmatpush1.msra.mxu0 %v486
        %550 = vmatprep.subr.mxu0 0.0
        %551 = vmatpush1.msra.mxu0 0.0
        %552 = vmatprep.subr.mxu0 0.0
        %553 = vmatpush1.msra.mxu0 0.0
        %554 = vmatprep.subr.mxu0 0.0
        %555 = vmatpush1.msra.mxu0 0.0
        %556 = vmatprep.subr.mxu0 0.0
        %557 = vmatpush1.msra.mxu0 0.0
        %558 = vmatprep.subr.mxu0 0.0
        %559 = vmatpush1.msra.mxu0 0.0
        %560 = vmatprep.subr.mxu0 0.0
        %561 = vmatpush1.msra.mxu0 0.0
        %562 = vmatprep.subr.mxu0 0.0
        %563 = vmatpush1.msra.mxu0 0.0
        %564 = vmatprep.subr.mxu0 0.0
        %565 = vmatpush1.msra.mxu0 0.0
        %566 = vmatprep.subr.mxu0 0.0
        %567 = vmatpush1.msra.mxu0 0.0
        %568 = vmatprep.subr.mxu0 0.0
        %569 = vmatpush1.msra.mxu0 0.0
        %570 = vmatprep.subr.mxu0 0.0
        %571 = vmatpush1.msra.mxu0 0.0
        %572 = vmatprep.subr.mxu0 0.0
        %573 = vmatpush1.msra.mxu0 0.0
        %574 = vmatprep.subr.mxu0 0.0
        %575 = vmatpush1.msra.mxu0 0.0
        %576 = vmatprep.subr.mxu0 0.0
        %577 = vmatpush1.msra.mxu0 0.0
        %578 = vmatprep.subr.mxu0 0.0
        %579 = vmatpush1.msra.mxu0 0.0
        %580 = vmatprep.subr.mxu0 0.0
        %581 = vmatpush1.msra.mxu0 0.0
        %582 = vmatprep.subr.mxu0 0.0
        %583 = vmatpush1.msra.mxu0 0.0
        %584 = vmatprep.subr.mxu0 0.0
        %585 = vmatpush1.msra.mxu0 0.0
        %586 = vmatprep.subr.mxu0 0.0
        %587 = vmatpush1.msra.mxu0 0.0
        %588 = vmatprep.subr.mxu0 0.0
        %589 = vmatpush1.msra.mxu0 0.0
        %590 = vmatprep.subr.mxu0 0.0
        %591 = vmatpush1.msra.mxu0 0.0
        %592 = vmatprep.subr.mxu0 0.0
        %593 = vmatpush1.msra.mxu0 0.0
        %594 = vmatprep.subr.mxu0 0.0
        %595 = vmatpush1.msra.mxu0 0.0
        %596 = vmatprep.subr.mxu0 0.0
        %597 = vmatpush1.msra.mxu0 0.0
        %598 = vmatprep.subr.mxu0 0.0
        %599 = vmatpush1.msra.mxu0 0.0
        %600 = vmatprep.subr.mxu0 0.0
        %601 = vmatpush1.msra.mxu0 0.0
        %602 = vmatprep.subr.mxu0 0.0
        %603 = vmatpush1.msra.mxu0 0.0
        %604 = vmatprep.subr.mxu0 0.0
        %605 = vmatpush1.msra.mxu0 0.0
        %606 = vmatprep.mubr.f32.mxu0 0.0
        %607 = vmatmul.mubr.f32.gmra.mrb[0].mxu0 %v495
        %v608 = vpop.f32.mrb[0].mxu0
        %v609 = vadd.f32 %v492, %v608
        %v610 = vpop.f32.mrb[0].mxu0
        %611 = vmatprep.mubr.f32.mxu0 0.0
        %612 = vmatmul.mubr.f32.gmra.mrb[0].mxu0 %v498
        %v613 = vpop.f32.mrb[0].mxu0
        %v614 = vadd.f32 %v492, %v613
        %v615 = vpop.f32.mrb[0].mxu0
        %616 = vmatprep.mubr.f32.mxu0 0.0
        %617 = vmatmul.mubr.f32.gmra.mrb[0].mxu0 %v501
        %v618 = vpop.f32.mrb[0].mxu0
        %v619 = vadd.f32 %v492, %v618
        %v620 = vpop.f32.mrb[0].mxu0
        %621 = vmatprep.mubr.f32.mxu0 0.0
        %622 = vmatmul.mubr.f32.gmra.mrb[0].mxu0 %v504
        %v623 = vpop.f32.mrb[0].mxu0
        %v624 = vadd.f32 %v492, %v623
        %v625 = vpop.f32.mrb[0].mxu0
        %626 = vmatprep.mubr.f32.mxu0 0.0
        %627 = vmatmul.mubr.f32.gmra.mrb[0].mxu0 %v507
        %v628 = vpop.f32.mrb[0].mxu0
        %v629 = vadd.f32 %v492, %v628
        %v630 = vpop.f32.mrb[0].mxu0
        %631 = vmatprep.mubr.f32.mxu0 0.0
        %632 = vmatmul.mubr.f32.gmra.mrb[0].mxu0 %v510
        %v633 = vpop.f32.mrb[0].mxu0
        %v634 = vadd.f32 %v492, %v633
        %v635 = vpop.f32.mrb[0].mxu0
        %636 = vmatprep.mubr.f32.mxu0 0.0
        %637 = vmatmul.mubr.f32.gmra.mrb[0].mxu0 %v513
        %v638 = vpop.f32.mrb[0].mxu0
        %v639 = vadd.f32 %v492, %v638
        %v640 = vpop.f32.mrb[0].mxu0
        %641 = vmatprep.mubr.f32.mxu0 0.0
        %642 = vmatmul.mubr.f32.gmra.mrb[0].mxu0 %v516
        %v643 = vpop.f32.mrb[0].mxu0
        %v644 = vadd.f32 %v492, %v643
        %v645 = vpop.f32.mrb[0].mxu0
        %646 = vmatprep.mubr.f32.mxu0 0.0
        %647 = vmatmul.mubr.f32.gmra.mrb[0].mxu0 %v519
        %v648 = vpop.f32.mrb[0].mxu0
        %v649 = vadd.f32 %v492, %v648
        %v650 = vpop.f32.mrb[0].mxu0
        %651 = vmatprep.mubr.f32.mxu0 0.0
        %652 = vmatmul.mubr.f32.gmra.mrb[0].mxu0 %v522
        %v653 = vpop.f32.mrb[0].mxu0
        %v654 = vadd.f32 %v492, %v653
        %v655 = vpop.f32.mrb[0].mxu0
        %656 = vmatprep.mubr.f32.mxu0 0.0
        %657 = vmatmul.mubr.f32.gmra.mrb[0].mxu0 %v525
        %v658 = vpop.f32.mrb[0].mxu0
        %v659 = vadd.f32 %v492, %v658
        %v660 = vpop.f32.mrb[0].mxu0
        %661 = vmatprep.mubr.f32.mxu0 0.0
        %662 = vmatmul.mubr.f32.gmra.mrb[0].mxu0 %v528
        %v663 = vpop.f32.mrb[0].mxu0
        %v664 = vadd.f32 %v492, %v663
        %v665 = vpop.f32.mrb[0].mxu0
        %666 = vmatprep.mubr.f32.mxu0 0.0
        %667 = vmatmul.mubr.f32.gmra.mrb[0].mxu0 %v531
        %v668 = vpop.f32.mrb[0].mxu0
        %v669 = vadd.f32 %v492, %v668
        %v670 = vpop.f32.mrb[0].mxu0
        %671 = vmatprep.mubr.f32.mxu0 0.0
        %672 = vmatmul.mubr.f32.gmra.mrb[0].mxu0 %v534
        %v673 = vpop.f32.mrb[0].mxu0
        %v674 = vadd.f32 %v492, %v673
        %v675 = vpop.f32.mrb[0].mxu0
        %676 = vmatprep.mubr.f32.mxu0 0.0
        %677 = vmatmul.mubr.f32.gmra.mrb[0].mxu0 %v537
        %v678 = vpop.f32.mrb[0].mxu0
        %v679 = vadd.f32 %v492, %v678
        %v680 = vpop.f32.mrb[0].mxu0
        %681 = vmatprep.mubr.f32.mxu0 0.0
        %682 = vmatmul.mubr.f32.gmra.mrb[0].mxu0 %v540
        %v683 = vpop.f32.mrb[0].mxu0
        %v684 = vadd.f32 %v492, %v683
        %v685 = vpop.f32.mrb[0].mxu0
        %686 = vdwg.mxu0
        %v687 = vtanh.pop %v609
        %v688 = vtanh.pop %v614
        %v689 = vtanh.pop %v619
        %v690 = vtanh.pop %v624
        %v691 = vtanh.pop %v629
        %v692 = vtanh.pop %v634
        %v693 = vtanh.pop %v639
        %v694 = vtanh.pop %v644
        %v695 = vtanh.pop %v649
        %v696 = vtanh.pop %v654
        %v697 = vtanh.pop %v659
        %v698 = vtanh.pop %v664
        %v699 = vtanh.pop %v669
        %v700 = vtanh.pop %v674
        %v701 = vtanh.pop %v679
        %v702 = vtanh.pop %v684
        %703 = vst.msk [vmem:[%s226] sm:$0xff] %vm273, %v687
        %704 = vst.msk [vmem:[%s226 + $0x8] sm:$0xff] %vm273, %v688
        %705 = vst.msk [vmem:[%s226 + $0x10] sm:$0xff] %vm273, %v689
        %706 = vst.msk [vmem:[%s226 + $0x18] sm:$0xff] %vm273, %v690
        %707 = vst.msk [vmem:[%s226 + $0x20] sm:$0xff] %vm273, %v691
        %708 = vst.msk [vmem:[%s226 + $0x28] sm:$0xff] %vm273, %v692
        %709 = vst.msk [vmem:[%s226 + $0x30] sm:$0xff] %vm273, %v693
        %710 = vst.msk [vmem:[%s226 + $0x38] sm:$0xff] %vm273, %v694
        %711 = vst.msk [vmem:[%s226 + $0x40] sm:$0xff] %vm273, %v695
        %712 = vst.msk [vmem:[%s226 + $0x48] sm:$0xff] %vm273, %v696
        %713 = vst.msk [vmem:[%s226 + $0x50] sm:$0xff] %vm273, %v697
        %714 = vst.msk [vmem:[%s226 + $0x58] sm:$0xff] %vm273, %v698
        %715 = vst.msk [vmem:[%s226 + $0x60] sm:$0xff] %vm273, %v699
        %716 = vst.msk [vmem:[%s226 + $0x68] sm:$0xff] %vm273, %v700
        %717 = vst.msk [vmem:[%s226 + $0x70] sm:$0xff] %vm273, %v701
        %718 = vst.msk [vmem:[%s226 + $0x78] sm:$0xff] %vm273, %v702
        %s719 = sand.u32 %s134, 1
        %s720 = sand.u32 %s134, 1
        %s721 = smul.addr %s720, 128
        %s722 = scalar_lea.vmem [#allocation2], %s721
        // Predicated region
        $region41: #{tpu_custom_call.1} parent=39 // pred_check
          %p723 = pneg %p144
        $region42: #{tpu_custom_call.1} parent=39 // pred_check_branch
          %725 = sbr.rel (%p723) target = $region44
        $region43: #{tpu_custom_call.1} parent=39 // pred_region
          %s726 = smul.u32 16, %s16
          %s727 = ssub.s32 25, %s726
          %p728 = scmp.lt.s32.totalorder %s727, 16
          %s729 = scalar_select %p728, %s727, 16
          %s730 = smul.u32 128, %s729
          %p731 = scmp.ne.s32.totalorder 0, %s730
          %s732 = smul.addr %s726, 8
          %s733 = scalar_lea.vmem %s5, %s732
          // Predicated region
          $region45: #{tpu_custom_call.1} parent=43 // pred_check
            %p734 = pneg %p731
          $region46: #{tpu_custom_call.1} parent=43 // pred_check_branch
            %736 = sbr.rel (%p734) target = $region48
          $region47: #{tpu_custom_call.1} parent=43 // pred_region
            // Predicated region
            $region49: #{tpu_custom_call.1} parent=47 // pred_check
              _
            $region50: #{tpu_custom_call.1} parent=47 // pred_check_branch
              %738 = sbr.rel (0) target = $region52
            $region51: #{tpu_custom_call.1} parent=47 // pred_region
              // Predicated region
              $region71: #{tpu_custom_call.1} parent=51 // pred_check
                _
              $region72: #{tpu_custom_call.1} parent=51 // pred_check_branch
                %817 = sbr.rel (0) target = $region74
              $region73: #{tpu_custom_call.1} parent=51 // pred_region
                %s818 = sshrl.u32 %s729, 4
                // While loop
                $region75: #{tpu_custom_call.1} parent=73 // loop_pre_header
                  _
                $region76: #{tpu_custom_call.1} parent=73 // loop_header
                  %s820 = sphi 0, %s822
                  %p821 = scmp.ge.s32.totalorder %s820, %s818
                  %s825 = sphi 0, %s862
                  %s826 = sphi %s722, %s865
                  %s827 = sphi %s733, %s866
                $region77: #{tpu_custom_call.1} parent=73 // loop_header_branch
                  %824 = sbr.rel (%p821) target = $region81
                $region78: #{tpu_custom_call.1} parent=73 // loop_body
                  %v828 = vld [vmem:[%s826] sm:$0xff]
                  %829 = vst [vmem:[%s827] sm:$0xff] %v828
                  %v830 = vld [vmem:[%s826 + $0x8] sm:$0xff]
                  %831 = vst [vmem:[%s827 + $0x8] sm:$0xff] %v830
                  %v832 = vld [vmem:[%s826 + $0x10] sm:$0xff]
                  %833 = vst [vmem:[%s827 + $0x10] sm:$0xff] %v832
                  %v834 = vld [vmem:[%s826 + $0x18] sm:$0xff]
                  %835 = vst [vmem:[%s827 + $0x18] sm:$0xff] %v834
                  %v836 = vld [vmem:[%s826 + $0x20] sm:$0xff]
                  %837 = vst [vmem:[%s827 + $0x20] sm:$0xff] %v836
                  %v838 = vld [vmem:[%s826 + $0x28] sm:$0xff]
                  %839 = vst [vmem:[%s827 + $0x28] sm:$0xff] %v838
                  %v840 = vld [vmem:[%s826 + $0x30] sm:$0xff]
                  %841 = vst [vmem:[%s827 + $0x30] sm:$0xff] %v840
                  %v842 = vld [vmem:[%s826 + $0x38] sm:$0xff]
                  %843 = vst [vmem:[%s827 + $0x38] sm:$0xff] %v842
                  %v844 = vld [vmem:[%s826 + $0x40] sm:$0xff]
                  %845 = vst [vmem:[%s827 + $0x40] sm:$0xff] %v844
                  %v846 = vld [vmem:[%s826 + $0x48] sm:$0xff]
                  %847 = vst [vmem:[%s827 + $0x48] sm:$0xff] %v846
                  %v848 = vld [vmem:[%s826 + $0x50] sm:$0xff]
                  %849 = vst [vmem:[%s827 + $0x50] sm:$0xff] %v848
                  %v850 = vld [vmem:[%s826 + $0x58] sm:$0xff]
                  %851 = vst [vmem:[%s827 + $0x58] sm:$0xff] %v850
                  %v852 = vld [vmem:[%s826 + $0x60] sm:$0xff]
                  %853 = vst [vmem:[%s827 + $0x60] sm:$0xff] %v852
                  %v854 = vld [vmem:[%s826 + $0x68] sm:$0xff]
                  %855 = vst [vmem:[%s827 + $0x68] sm:$0xff] %v854
                  %v856 = vld [vmem:[%s826 + $0x70] sm:$0xff]
                  %857 = vst [vmem:[%s827 + $0x70] sm:$0xff] %v856
                  %v858 = vld [vmem:[%s826 + $0x78] sm:$0xff]
                  %859 = vst [vmem:[%s827 + $0x78] sm:$0xff] %v858
                  %s860 = sadd.s32 1, %s825
                  %p861 = scmp.ge.s32.totalorder %s860, %s818
                  %s862 = scalar_select %p861, 0, %s860
                  %s863 = smul.u32 %s862, 128
                  %s864 = smul.u32 %s862, 128
                  %s865 = scalar_lea.vmem %s722, %s863 [#allocation2]
                  %s866 = scalar_lea.vmem %s733, %s864
                $region79: #{tpu_custom_call.1} parent=73 // loop_footer
                  %s822 = sadd.s32 %s820, 1
                $region80: #{tpu_custom_call.1} parent=73 // loop_footer_branch
                  %819 = sbr.rel target = $region76
                $region81: #{tpu_custom_call.1} parent=73 // loop_exit
                  _
                %s867 = sshrl.u32 %s729, 4
                %s868 = sand.u32 %s729, 15
                %s869 = smul.u32 %s867, 16
                %s870 = smul.u32 8, %s869
                %s871 = scalar_lea.vmem %s722, %s870 [#allocation2]
                %s872 = smul.u32 8, %s869
                %s873 = scalar_lea.vmem %s733, %s872
                // While loop
                $region82: #{tpu_custom_call.1} parent=73 // loop_pre_header
                  _
                $region83: #{tpu_custom_call.1} parent=73 // loop_header
                  %s875 = sphi 0, %s877
                  %p876 = scmp.ge.s32.totalorder %s875, %s868
                  %s880 = sphi 0, %s887
                  %s881 = sphi %s871, %s890
                  %s882 = sphi %s873, %s891
                $region84: #{tpu_custom_call.1} parent=73 // loop_header_branch
                  %879 = sbr.rel (%p876) target = $region88
                $region85: #{tpu_custom_call.1} parent=73 // loop_body
                  %v883 = vld [vmem:[%s881] sm:$0xff]
                  %884 = vst [vmem:[%s882] sm:$0xff] %v883
                  %s885 = sadd.s32 1, %s880
                  %p886 = scmp.ge.s32.totalorder %s885, %s868
                  %s887 = scalar_select %p886, 0, %s885
                  %s888 = smul.u32 %s887, 8
                  %s889 = smul.u32 %s887, 8
                  %s890 = scalar_lea.vmem %s871, %s888 [#allocation2]
                  %s891 = scalar_lea.vmem %s873, %s889
                $region86: #{tpu_custom_call.1} parent=73 // loop_footer
                  %s877 = sadd.s32 %s875, 1
                $region87: #{tpu_custom_call.1} parent=73 // loop_footer_branch
                  %874 = sbr.rel target = $region83
                $region88: #{tpu_custom_call.1} parent=73 // loop_exit
                  _
              $region74: #{tpu_custom_call.1} parent=51 // pred_fallthru
                _
              // Predicated region
              $region89: #{tpu_custom_call.1} parent=51 // pred_check
                _
              $region90: #{tpu_custom_call.1} parent=51 // pred_check_branch
                %893 = sbr.rel target = $region92
              $region91: #{tpu_custom_call.1} parent=51 // pred_region
                _
              $region92: #{tpu_custom_call.1} parent=51 // pred_fallthru
                _
            $region52: #{tpu_custom_call.1} parent=47 // pred_fallthru
              _
            // Predicated region
            $region53: #{tpu_custom_call.1} parent=47 // pred_check
              _
            $region54: #{tpu_custom_call.1} parent=47 // pred_check_branch
              %740 = sbr.rel target = $region56
            $region55: #{tpu_custom_call.1} parent=47 // pred_region
              %s742 = sshrl.u32 %s729, 4
              // While loop
              $region57: #{tpu_custom_call.1} parent=55 // loop_pre_header
                _
              $region58: #{tpu_custom_call.1} parent=55 // loop_header
                %s744 = sphi 0, %s746
                %p745 = scmp.ge.s32.totalorder %s744, %s742
                %s749 = sphi 0, %s786
                %s750 = sphi %s722, %s789
                %s751 = sphi %s733, %s790
              $region59: #{tpu_custom_call.1} parent=55 // loop_header_branch
                %748 = sbr.rel (%p745) target = $region63
              $region60: #{tpu_custom_call.1} parent=55 // loop_body
                %v752 = vld [vmem:[%s750] sm:$0xff]
                %753 = vst [vmem:[%s751] sm:$0xff] %v752
                %v754 = vld [vmem:[%s750 + $0x8] sm:$0xff]
                %755 = vst [vmem:[%s751 + $0x8] sm:$0xff] %v754
                %v756 = vld [vmem:[%s750 + $0x10] sm:$0xff]
                %757 = vst [vmem:[%s751 + $0x10] sm:$0xff] %v756
                %v758 = vld [vmem:[%s750 + $0x18] sm:$0xff]
                %759 = vst [vmem:[%s751 + $0x18] sm:$0xff] %v758
                %v760 = vld [vmem:[%s750 + $0x20] sm:$0xff]
                %761 = vst [vmem:[%s751 + $0x20] sm:$0xff] %v760
                %v762 = vld [vmem:[%s750 + $0x28] sm:$0xff]
                %763 = vst [vmem:[%s751 + $0x28] sm:$0xff] %v762
                %v764 = vld [vmem:[%s750 + $0x30] sm:$0xff]
                %765 = vst [vmem:[%s751 + $0x30] sm:$0xff] %v764
                %v766 = vld [vmem:[%s750 + $0x38] sm:$0xff]
                %767 = vst [vmem:[%s751 + $0x38] sm:$0xff] %v766
                %v768 = vld [vmem:[%s750 + $0x40] sm:$0xff]
                %769 = vst [vmem:[%s751 + $0x40] sm:$0xff] %v768
                %v770 = vld [vmem:[%s750 + $0x48] sm:$0xff]
                %771 = vst [vmem:[%s751 + $0x48] sm:$0xff] %v770
                %v772 = vld [vmem:[%s750 + $0x50] sm:$0xff]
                %773 = vst [vmem:[%s751 + $0x50] sm:$0xff] %v772
                %v774 = vld [vmem:[%s750 + $0x58] sm:$0xff]
                %775 = vst [vmem:[%s751 + $0x58] sm:$0xff] %v774
                %v776 = vld [vmem:[%s750 + $0x60] sm:$0xff]
                %777 = vst [vmem:[%s751 + $0x60] sm:$0xff] %v776
                %v778 = vld [vmem:[%s750 + $0x68] sm:$0xff]
                %779 = vst [vmem:[%s751 + $0x68] sm:$0xff] %v778
                %v780 = vld [vmem:[%s750 + $0x70] sm:$0xff]
                %781 = vst [vmem:[%s751 + $0x70] sm:$0xff] %v780
                %v782 = vld [vmem:[%s750 + $0x78] sm:$0xff]
                %783 = vst [vmem:[%s751 + $0x78] sm:$0xff] %v782
                %s784 = sadd.s32 1, %s749
                %p785 = scmp.ge.s32.totalorder %s784, %s742
                %s786 = scalar_select %p785, 0, %s784
                %s787 = smul.u32 %s786, 128
                %s788 = smul.u32 %s786, 128
                %s789 = scalar_lea.vmem %s722, %s787 [#allocation2]
                %s790 = scalar_lea.vmem %s733, %s788
              $region61: #{tpu_custom_call.1} parent=55 // loop_footer
                %s746 = sadd.s32 %s744, 1
              $region62: #{tpu_custom_call.1} parent=55 // loop_footer_branch
                %743 = sbr.rel target = $region58
              $region63: #{tpu_custom_call.1} parent=55 // loop_exit
                _
              %s791 = sshrl.u32 %s729, 4
              %s792 = sand.u32 %s729, 15
              %s793 = smul.u32 %s791, 16
              %s794 = smul.u32 8, %s793
              %s795 = scalar_lea.vmem %s722, %s794 [#allocation2]
              %s796 = smul.u32 8, %s793
              %s797 = scalar_lea.vmem %s733, %s796
              // While loop
              $region64: #{tpu_custom_call.1} parent=55 // loop_pre_header
                _
              $region65: #{tpu_custom_call.1} parent=55 // loop_header
                %s799 = sphi 0, %s801
                %p800 = scmp.ge.s32.totalorder %s799, %s792
                %s804 = sphi 0, %s811
                %s805 = sphi %s795, %s814
                %s806 = sphi %s797, %s815
              $region66: #{tpu_custom_call.1} parent=55 // loop_header_branch
                %803 = sbr.rel (%p800) target = $region70
              $region67: #{tpu_custom_call.1} parent=55 // loop_body
                %v807 = vld [vmem:[%s805] sm:$0xff]
                %808 = vst [vmem:[%s806] sm:$0xff] %v807
                %s809 = sadd.s32 1, %s804
                %p810 = scmp.ge.s32.totalorder %s809, %s792
                %s811 = scalar_select %p810, 0, %s809
                %s812 = smul.u32 %s811, 8
                %s813 = smul.u32 %s811, 8
                %s814 = scalar_lea.vmem %s795, %s812 [#allocation2]
                %s815 = scalar_lea.vmem %s797, %s813
              $region68: #{tpu_custom_call.1} parent=55 // loop_footer
                %s801 = sadd.s32 %s799, 1
              $region69: #{tpu_custom_call.1} parent=55 // loop_footer_branch
                %798 = sbr.rel target = $region65
              $region70: #{tpu_custom_call.1} parent=55 // loop_exit
                _
            $region56: #{tpu_custom_call.1} parent=47 // pred_fallthru
              _
          $region48: #{tpu_custom_call.1} parent=43 // pred_fallthru
            _
          %894 = vnop
        $region44: #{tpu_custom_call.1} parent=39 // pred_fallthru
          _
      $region40: #{tpu_custom_call.1} parent=5 // pred_fallthru
        _
      %p895 = scmp.le.s32.totalorder 2, %s11
      // Predicated region
      $region93: #{tpu_custom_call.1} parent=5 // pred_check
        %p896 = pneg %p895
      $region94: #{tpu_custom_call.1} parent=5 // pred_check_branch
        %898 = sbr.rel (%p896) target = $region96
      $region95: #{tpu_custom_call.1} parent=5 // pred_region
        %s899 = ssub.s32 %s11, 2
        // Predicated region
        $region97: #{tpu_custom_call.1} parent=95 // pred_check
          %p900 = pneg %p150
        $region98: #{tpu_custom_call.1} parent=95 // pred_check_branch
          %902 = sbr.rel (%p900) target = $region100
        $region99: #{tpu_custom_call.1} parent=95 // pred_region
          %s903 = sand.u32 %s135, 1
          %s904 = sand.u32 %s135, 1
          %s905 = smul.addr %s904, 128
          %s906 = scalar_lea.vmem [#allocation2], %s905
        $region100: #{tpu_custom_call.1} parent=95 // pred_fallthru
          _
      $region96: #{tpu_custom_call.1} parent=5 // pred_fallthru
        _
    $region6: #{tpu_custom_call.1} parent=1 // loop_footer
      %s15 = sadd.s32 1, %s11
    $region7: #{tpu_custom_call.1} parent=1 // loop_footer_branch
      %10 = sbr.rel target = $region3
    $region8: #{tpu_custom_call.1} parent=1 // loop_exit
      _

</llo_original>
